<compile_context>
chip_gen: v6e
topology: v6e:2x2x1
jax: 0.10.0
libtpu: 0.0.40
codegen_flags: <defaults>
</compile_context>

<pallas_src>
import functools
import math

import jax
import jax.numpy as jnp
import numpy as np
from jax import lax
from jax.experimental import pallas as pl
from jax.experimental.pallas import tpu as pltpu

_INV_SQRT2 = 1.0 / math.sqrt(2.0)
_SQRT_2_OVER_PI = math.sqrt(2.0 / math.pi)


def _gelu(x, approximate):
    if approximate:
        # tanh-approx GELU: transcendental runs on the EUP slot (relieves the VALU).
        return 0.5 * x * (1.0 + jnp.tanh(_SQRT_2_OVER_PI * (x + 0.044715 * (x * x * x))))
    # exact erf GELU (bit parity with nn.GELU() default, ~1e-3 away from tanh approx).
    return 0.5 * x * (1.0 + lax.erf(x * _INV_SQRT2))


def _slice_upsamp_kernel(x_ref, top_ref, bot_ref, nf_ref, nl_ref,
                         dww_ref, dwb_ref, pww_ref, pwb_ref, o_ref,
                         *, approximate):
    """One (batch, H-strip) tile, fully lane-dense.

    x_ref  : (1, Cin, TH*W2)   flat strip (rows on lanes, row-major)
    top_ref: (1, 1, Cin, W2)   row just above the strip (zeros at the image top)
    bot_ref: (1, 1, Cin, W2)   row just below the strip (zeros at the image bottom)
    nf_ref : (1, TH*W2)        0.0 where column == 0,    else 1.0
    nl_ref : (1, TH*W2)        0.0 where column == W2-1, else 1.0
    dww_ref: (9, Cin, 1)       depthwise 3x3 taps (tap-major kh*3+kw), BN scale folded in
    dwb_ref: (Cin, 1)          depthwise BN bias
    pww_ref: (Cout, Cin)       pointwise 1x1 weight, BN scale folded in
    pwb_ref: (Cout, 1)         pointwise BN bias
    o_ref  : (1, Cout, TH*W2)  lane-dense output strip (NCHW flattened over HW)
    """
    n = x_ref.shape[2]
    w2 = top_ref.shape[3]

    x = x_ref[0]                                    # (Cin, N)
    top = top_ref[0, 0]                             # (Cin, W2)
    bot = bot_ref[0, 0]                             # (Cin, W2)

    # Row (H) shifts in the flat layout: one W2-lane shifted copy each, with the halo
    # row spliced in (zero rows at the image border were baked in by the wrapper).
    if n == w2:                                     # TH == 1
        x_up, x_dn = top, bot
    else:
        x_up = jnp.concatenate([top, x[:, :n - w2]], axis=1)   # value of row r-1
        x_dn = jnp.concatenate([x[:, w2:], bot], axis=1)       # value of row r+1

    # Depthwise 3x3: group the 9 taps by column offset -> 9 broadcast FMAs, then a single
    # lane roll (XLU slot) + a single {0,1}-mask multiply per non-zero column offset.
    w = dww_ref[...]                                # (9, Cin, 1)
    g_left = x_up * w[0] + x * w[3] + x_dn * w[6]     # taps reading column c-1
    g_mid = x_up * w[1] + x * w[4] + x_dn * w[7]      # taps reading column c
    g_right = x_up * w[2] + x * w[5] + x_dn * w[8]    # taps reading column c+1

    acc = (g_mid
           + nf_ref[...] * pltpu.roll(g_left, 1, axis=1)        # value at c-1
           + nl_ref[...] * pltpu.roll(g_right, n - 1, axis=1))  # value at c+1

    y = _gelu(acc + dwb_ref[...], approximate)      # (Cin, N)

    # Pointwise 1x1 on the MXU, consuming y directly (no relayout): (Cout,Cin)@(Cin,N).
    z = jnp.dot(pww_ref[...], y, preferred_element_type=jnp.float32)
    o_ref[0] = _gelu(z + pwb_ref[...], approximate)


def _vmem_capacity_bytes():
    try:
        return int(getattr(pltpu.get_tpu_info(), "vmem_capacity_bytes", 64 << 20))
    except Exception:
        return 64 << 20


def _per_row_bytes(W2, Cin, Cout):
    # conservative: 2x-buffered in/out blocks + ~8 live Cin-wide temps + Cout-wide temps
    return 4 * W2 * (12 * Cin + 5 * Cout)


def _pick_tile_h(B, H2, W2, Cin, Cout, budget_bytes):
    """Largest strip height TH that divides H2, keeps TH*W2 lane-aligned (128) and fits
    the VMEM budget; capped so the grid has >= 2 steps (v7x megacore) when possible."""
    cands = [t for t in range(1, H2 + 1) if H2 % t == 0 and (t * W2) % 128 == 0]
    if not cands:
        return H2                                    # full-extent block (always legal)
    per_row = _per_row_bytes(W2, Cin, Cout)
    fit = [t for t in cands if t * per_row <= budget_bytes] or [min(cands)]
    th = max(fit)
    if B * (H2 // th) < 2:                           # keep both v7x TensorCores busy
        multi = [t for t in fit if H2 // t >= 2]
        if multi:
            th = max(multi)
    return th


def slice_upsamp_forward(X, dw_weight, dw_gamma, dw_beta, dw_mean, dw_var,
                         pw_weight, pw_gamma, pw_beta, pw_mean, pw_var,
                         *, eps=1e-5, tile_h=None, approximate_gelu=True):
    """X: (B, C, H, W) f32 NCHW. PyTorch-layout weights:
    dw_weight (C//4, 1, 3, 3), pw_weight (Cout, C//4, 1, 1). Returns (B, Cout, 2H, 2W)."""
    B, C, H, W = X.shape
    assert C % 4 == 0, "Number of input channels must be divisible by 4"
    Cin = C // 4
    Cout = pw_weight.shape[0]
    assert dw_weight.shape == (Cin, 1, 3, 3)
    assert pw_weight.shape == (Cout, Cin, 1, 1)
    H2, W2 = 2 * H, 2 * W
    f32 = jnp.float32

    # --- "slice upsampling": pure layout shuffle (one XLA relayout), then flatten HW. ---
    Xu = X.astype(f32).reshape(B, Cin, 4, H, W).transpose(0, 1, 3, 4, 2).reshape(B, Cin, H2, W2)
    Xu_flat = Xu.reshape(B, Cin, H2 * W2)

    # --- fold inference-mode BN into the conv weights / biases (exact affine fold). ---
    # TODO(synk): training-mode BatchNorm (batch statistics) is not computed in-kernel.
    dw_scale = dw_gamma / jnp.sqrt(dw_var + eps)
    dw_bias = dw_beta - dw_mean * dw_scale
    pw_scale = pw_gamma / jnp.sqrt(pw_var + eps)
    pw_bias = pw_beta - pw_mean * pw_scale

    dww = dw_weight[:, 0, :, :].astype(f32) * dw_scale[:, None, None]   # (Cin, 3, 3)
    dww = jnp.transpose(dww, (1, 2, 0)).reshape(9, Cin, 1)              # tap-major kh*3+kw
    dwb = dw_bias.astype(f32).reshape(Cin, 1)
    pww = pw_weight[:, :, 0, 0].astype(f32) * pw_scale[:, None]         # (Cout, Cin)
    pwb = pw_bias.astype(f32).reshape(Cout, 1)

    # --- generation-aware tile size & explicit VMEM limit ---
    vmem_cap = _vmem_capacity_bytes()
    budget = min(vmem_cap // 4, 40 << 20)
    if tile_h is None:
        TH = _pick_tile_h(B, H2, W2, Cin, Cout, budget)
    else:
        TH = int(tile_h)
        ok = (H2 % TH == 0) and (TH == H2 or (TH * W2) % 128 == 0)
        if not ok:
            raise ValueError(f"tile_h={TH} incompatible with H2={H2}, W2={W2}")
    nH = H2 // TH
    N = TH * W2
    est_bytes = TH * _per_row_bytes(W2, Cin, Cout)
    vmem_limit = int(min(vmem_cap * 3 // 4, max(32 << 20, est_bytes + (8 << 20))))

    # --- single-row halos, zero-padded at the image border: per-strip halo DMA is
    #     2 rows (not 2x8), and the kernel needs no border masks / clamped indices. ---
    zrow = jnp.zeros((B, Cin, 1, W2), f32)
    if nH > 1:
        tops = Xu[:, :, TH - 1:H2 - 1:TH, :]         # rows TH-1, 2TH-1, ..., H2-TH-1
        bots = Xu[:, :, TH::TH, :]                   # rows TH, 2TH, ..., (nH-1)*TH
        top_rows = jnp.concatenate([zrow, tops], axis=2)
        bot_rows = jnp.concatenate([bots, zrow], axis=2)
    else:
        top_rows, bot_rows = zrow, zrow
    top_rows = top_rows.transpose(0, 2, 1, 3)        # (B, nH, Cin, W2)
    bot_rows = bot_rows.transpose(0, 2, 1, 3)

    # --- column-edge masks, hoisted to the wrapper ({0,1} multipliers; no iota/rem in-kernel) ---
    col = np.arange(N, dtype=np.int64) % W2
    not_first = jnp.asarray((col != 0).astype(np.float32)).reshape(1, N)
    not_last = jnp.asarray((col != W2 - 1).astype(np.float32)).reshape(1, N)

    kernel = functools.partial(_slice_upsamp_kernel, approximate=approximate_gelu)

    out_flat = pl.pallas_call(
        kernel,
        out_shape=jax.ShapeDtypeStruct((B, Cout, H2 * W2), f32),
        grid=(B, nH),
        in_specs=[
            pl.BlockSpec((1, Cin, N), lambda b, i: (b, 0, i)),
            pl.BlockSpec((1, 1, Cin, W2), lambda b, i: (b, i, 0, 0)),
            pl.BlockSpec((1, 1, Cin, W2), lambda b, i: (b, i, 0, 0)),
            pl.BlockSpec((1, N), lambda b, i: (0, 0)),
            pl.BlockSpec((1, N), lambda b, i: (0, 0)),
            pl.BlockSpec((9, Cin, 1), lambda b, i: (0, 0, 0)),
            pl.BlockSpec((Cin, 1), lambda b, i: (0, 0)),
            pl.BlockSpec((Cout, Cin), lambda b, i: (0, 0)),
            pl.BlockSpec((Cout, 1), lambda b, i: (0, 0)),
        ],
        out_specs=pl.BlockSpec((1, Cout, N), lambda b, i: (b, 0, i)),
        compiler_params=pltpu.CompilerParams(
            dimension_semantics=("parallel", "parallel"),
            vmem_limit_bytes=vmem_limit),
    )(Xu_flat, top_rows, bot_rows, not_first, not_last, dww, dwb, pww, pwb)

    # Free (contiguous, metadata-only) reshape back to NCHW.
    return out_flat.reshape(B, Cout, H2, W2)


def reference_forward(X, dw_weight, dw_gamma, dw_beta, dw_mean, dw_var,
                      pw_weight, pw_gamma, pw_beta, pw_mean, pw_var,
                      *, eps=1e-5, approximate_gelu=True):
    """Pure-JAX (XLA) reference: same math as the PyTorch module with inference-mode BN
    (BN folded into the conv weights, which is an exact affine identity)."""
    B, C, H, W = X.shape
    Cin = C // 4
    Xu = X.reshape(B, Cin, 4, H, W).transpose(0, 1, 3, 4, 2).reshape(B, Cin, 2 * H, 2 * W)

    dw_scale = dw_gamma / jnp.sqrt(dw_var + eps)
    dw_bias = dw_beta - dw_mean * dw_scale
    pw_scale = pw_gamma / jnp.sqrt(pw_var + eps)
    pw_bias = pw_beta - pw_mean * pw_scale

    w = dw_weight * dw_scale[:, None, None, None]                       # (Cin, 1, 3, 3)
    y = lax.conv_general_dilated(
        Xu, w, window_strides=(1, 1), padding=[(1, 1), (1, 1)],
        dimension_numbers=("NCHW", "OIHW", "NCHW"), feature_group_count=Cin)
    y = _gelu(y + dw_bias[None, :, None, None], approximate_gelu)

    pw = pw_weight[:, :, 0, 0] * pw_scale[:, None]                      # (Cout, Cin)
    z = jnp.einsum("bchw,oc->bohw", y, pw)
    return _gelu(z + pw_bias[None, :, None, None], approximate_gelu)


if __name__ == "__main__":
    key = jax.random.PRNGKey(0)
    ks = jax.random.split(key, 11)

    # Small shapes consistent with the module: C divisible by 4.
    B, C, H, W = 2, 32, 16, 16
    out_channels = 16
    Cin = C // 4
    eps = 1e-5

    X = jax.random.normal(ks[0], (B, C, H, W), jnp.float32)

    # PyTorch-native parameter layouts.
    dw_weight = 0.2 * jax.random.normal(ks[1], (Cin, 1, 3, 3), jnp.float32)
    dw_gamma = 1.0 + 0.1 * jax.random.normal(ks[2], (Cin,), jnp.float32)
    dw_beta = 0.1 * jax.random.normal(ks[3], (Cin,), jnp.float32)
    dw_mean = 0.1 * jax.random.normal(ks[4], (Cin,), jnp.float32)
    dw_var = jnp.abs(jax.random.normal(ks[5], (Cin,), jnp.float32)) + 0.5

    pw_weight = 0.2 * jax.random.normal(ks[6], (out_channels, Cin, 1, 1), jnp.float32)
    pw_gamma = 1.0 + 0.1 * jax.random.normal(ks[7], (out_channels,), jnp.float32)
    pw_beta = 0.1 * jax.random.normal(ks[8], (out_channels,), jnp.float32)
    pw_mean = 0.1 * jax.random.normal(ks[9], (out_channels,), jnp.float32)
    pw_var = jnp.abs(jax.random.normal(ks[10], (out_channels,), jnp.float32)) + 0.5

    # 1) default path (tanh GELU on the EUP); tile_h=8 -> grid (B, 4) exercises strips
    #    with real top/bottom halo rows.
    out = slice_upsamp_forward(X, dw_weight, dw_gamma, dw_beta, dw_mean, dw_var,
                               pw_weight, pw_gamma, pw_beta, pw_mean, pw_var,
                               eps=eps, tile_h=8, approximate_gelu=True)
    out = jax.block_until_ready(out)
    ref = reference_forward(X, dw_weight, dw_gamma, dw_beta, dw_mean, dw_var,
                            pw_weight, pw_gamma, pw_beta, pw_mean, pw_var,
                            eps=eps, approximate_gelu=True)
    np.testing.assert_allclose(np.asarray(out), np.asarray(ref), rtol=2e-3, atol=2e-3)

    # 2) exact-erf GELU path (bit parity with nn.GELU()) with auto tile selection.
    out2 = slice_upsamp_forward(X, dw_weight, dw_gamma, dw_beta, dw_mean, dw_var,
                                pw_weight, pw_gamma, pw_beta, pw_mean, pw_var,
                                eps=eps, approximate_gelu=False)
    out2 = jax.block_until_ready(out2)
    ref2 = reference_forward(X, dw_weight, dw_gamma, dw_beta, dw_mean, dw_var,
                             pw_weight, pw_gamma, pw_beta, pw_mean, pw_var,
                             eps=eps, approximate_gelu=False)
    np.testing.assert_allclose(np.asarray(out2), np.asarray(ref2), rtol=2e-3, atol=2e-3)

    print("KERNEL_OK")
</pallas_src>

<mosaic_0001>
module attributes {stable_mosaic.version = 11 : i64} {
  func.func @_slice_upsamp_kernel(%arg0: i32, %arg1: i32, %arg2: memref<1x8x256xf32, #tpu.memory_space<vmem>>, %arg3: memref<1x1x8x32xf32, #tpu.memory_space<vmem>>, %arg4: memref<1x1x8x32xf32, #tpu.memory_space<vmem>>, %arg5: memref<1x256xf32, #tpu.memory_space<vmem>>, %arg6: memref<1x256xf32, #tpu.memory_space<vmem>>, %arg7: memref<9x8x1xf32, #tpu.memory_space<vmem>>, %arg8: memref<8x1xf32, #tpu.memory_space<vmem>>, %arg9: memref<16x8xf32, #tpu.memory_space<vmem>>, %arg10: memref<16x1xf32, #tpu.memory_space<vmem>>, %arg11: memref<1x16x256xf32, #tpu.memory_space<vmem>>) attributes {dimension_semantics = [#tpu.dimension_semantics<parallel>, #tpu.dimension_semantics<parallel>], iteration_bounds = array<i64: 2, 4>, scalar_prefetch = 0 : i64, scratch_operands = 0 : i64, tpu.core_type = #tpu.core_type<tc>, window_params = [{transform_indices = @transform_0, window_bounds = array<i64: 1, 8, 256>}, {transform_indices = @transform_1, window_bounds = array<i64: 1, 1, 8, 32>}, {transform_indices = @transform_2, window_bounds = array<i64: 1, 1, 8, 32>}, {pipeline_mode = #tpu.pipeline_mode<synchronous>, transform_indices = @transform_3, window_bounds = array<i64: 1, 256>}, {pipeline_mode = #tpu.pipeline_mode<synchronous>, transform_indices = @transform_4, window_bounds = array<i64: 1, 256>}, {pipeline_mode = #tpu.pipeline_mode<synchronous>, transform_indices = @transform_5, window_bounds = array<i64: 9, 8, 1>}, {pipeline_mode = #tpu.pipeline_mode<synchronous>, transform_indices = @transform_6, window_bounds = array<i64: 8, 1>}, {pipeline_mode = #tpu.pipeline_mode<synchronous>, transform_indices = @transform_7, window_bounds = array<i64: 16, 8>}, {pipeline_mode = #tpu.pipeline_mode<synchronous>, transform_indices = @transform_8, window_bounds = array<i64: 16, 1>}, {transform_indices = @transform_9, window_bounds = array<i64: 1, 16, 256>}]} {
    %c0 = arith.constant 0 : index
    %c0_0 = arith.constant 0 : index
    %c0_1 = arith.constant 0 : index
    %0 = vector.load %arg2[%c0, %c0_0, %c0_1] : memref<1x8x256xf32, #tpu.memory_space<vmem>>, vector<1x8x256xf32>
    %1 = vector.shape_cast %0 : vector<1x8x256xf32> to vector<8x256xf32>
    %c0_2 = arith.constant 0 : index
    %c0_3 = arith.constant 0 : index
    %c0_4 = arith.constant 0 : index
    %c0_5 = arith.constant 0 : index
    %2 = vector.load %arg3[%c0_2, %c0_3, %c0_4, %c0_5] : memref<1x1x8x32xf32, #tpu.memory_space<vmem>>, vector<1x1x8x32xf32>
    %3 = vector.shape_cast %2 : vector<1x1x8x32xf32> to vector<8x32xf32>
    %c0_6 = arith.constant 0 : index
    %c0_7 = arith.constant 0 : index
    %c0_8 = arith.constant 0 : index
    %c0_9 = arith.constant 0 : index
    %4 = vector.load %arg4[%c0_6, %c0_7, %c0_8, %c0_9] : memref<1x1x8x32xf32, #tpu.memory_space<vmem>>, vector<1x1x8x32xf32>
    %5 = vector.shape_cast %4 : vector<1x1x8x32xf32> to vector<8x32xf32>
    %6 = vector.extract_strided_slice %1 {offsets = [0, 0], sizes = [8, 224], strides = [1, 1]} : vector<8x256xf32> to vector<8x224xf32>
    %7 = tpu.concatenate %3, %6 in 1 : vector<8x32xf32>, vector<8x224xf32> -> vector<8x256xf32>
    %8 = vector.extract_strided_slice %1 {offsets = [0, 32], sizes = [8, 224], strides = [1, 1]} : vector<8x256xf32> to vector<8x224xf32>
    %9 = tpu.concatenate %8, %5 in 1 : vector<8x224xf32>, vector<8x32xf32> -> vector<8x256xf32>
    %c0_10 = arith.constant 0 : index
    %c0_11 = arith.constant 0 : index
    %c0_12 = arith.constant 0 : index
    %10 = vector.load %arg7[%c0_10, %c0_11, %c0_12] : memref<9x8x1xf32, #tpu.memory_space<vmem>>, vector<9x8x1xf32>
    %11 = vector.extract_strided_slice %10 {offsets = [0, 0, 0], sizes = [1, 8, 1], strides = [1, 1, 1]} : vector<9x8x1xf32> to vector<1x8x1xf32>
    %12 = vector.shape_cast %11 : vector<1x8x1xf32> to vector<8x1xf32>
    %13 = vector.broadcast %12 : vector<8x1xf32> to vector<8x256xf32>
    %14 = arith.mulf %7, %13 : vector<8x256xf32>
    %15 = vector.extract_strided_slice %10 {offsets = [3, 0, 0], sizes = [1, 8, 1], strides = [1, 1, 1]} : vector<9x8x1xf32> to vector<1x8x1xf32>
    %16 = vector.shape_cast %15 : vector<1x8x1xf32> to vector<8x1xf32>
    %17 = vector.broadcast %16 : vector<8x1xf32> to vector<8x256xf32>
    %18 = arith.mulf %1, %17 : vector<8x256xf32>
    %19 = arith.addf %14, %18 : vector<8x256xf32>
    %20 = vector.extract_strided_slice %10 {offsets = [6, 0, 0], sizes = [1, 8, 1], strides = [1, 1, 1]} : vector<9x8x1xf32> to vector<1x8x1xf32>
    %21 = vector.shape_cast %20 : vector<1x8x1xf32> to vector<8x1xf32>
    %22 = vector.broadcast %21 : vector<8x1xf32> to vector<8x256xf32>
    %23 = arith.mulf %9, %22 : vector<8x256xf32>
    %24 = arith.addf %19, %23 : vector<8x256xf32>
    %25 = vector.extract_strided_slice %10 {offsets = [1, 0, 0], sizes = [1, 8, 1], strides = [1, 1, 1]} : vector<9x8x1xf32> to vector<1x8x1xf32>
    %26 = vector.shape_cast %25 : vector<1x8x1xf32> to vector<8x1xf32>
    %27 = vector.broadcast %26 : vector<8x1xf32> to vector<8x256xf32>
    %28 = arith.mulf %7, %27 : vector<8x256xf32>
    %29 = vector.extract_strided_slice %10 {offsets = [4, 0, 0], sizes = [1, 8, 1], strides = [1, 1, 1]} : vector<9x8x1xf32> to vector<1x8x1xf32>
    %30 = vector.shape_cast %29 : vector<1x8x1xf32> to vector<8x1xf32>
    %31 = vector.broadcast %30 : vector<8x1xf32> to vector<8x256xf32>
    %32 = arith.mulf %1, %31 : vector<8x256xf32>
    %33 = arith.addf %28, %32 : vector<8x256xf32>
    %34 = vector.extract_strided_slice %10 {offsets = [7, 0, 0], sizes = [1, 8, 1], strides = [1, 1, 1]} : vector<9x8x1xf32> to vector<1x8x1xf32>
    %35 = vector.shape_cast %34 : vector<1x8x1xf32> to vector<8x1xf32>
    %36 = vector.broadcast %35 : vector<8x1xf32> to vector<8x256xf32>
    %37 = arith.mulf %9, %36 : vector<8x256xf32>
    %38 = arith.addf %33, %37 : vector<8x256xf32>
    %39 = vector.extract_strided_slice %10 {offsets = [2, 0, 0], sizes = [1, 8, 1], strides = [1, 1, 1]} : vector<9x8x1xf32> to vector<1x8x1xf32>
    %40 = vector.shape_cast %39 : vector<1x8x1xf32> to vector<8x1xf32>
    %41 = vector.broadcast %40 : vector<8x1xf32> to vector<8x256xf32>
    %42 = arith.mulf %7, %41 : vector<8x256xf32>
    %43 = vector.extract_strided_slice %10 {offsets = [5, 0, 0], sizes = [1, 8, 1], strides = [1, 1, 1]} : vector<9x8x1xf32> to vector<1x8x1xf32>
    %44 = vector.shape_cast %43 : vector<1x8x1xf32> to vector<8x1xf32>
    %45 = vector.broadcast %44 : vector<8x1xf32> to vector<8x256xf32>
    %46 = arith.mulf %1, %45 : vector<8x256xf32>
    %47 = arith.addf %42, %46 : vector<8x256xf32>
    %48 = vector.extract_strided_slice %10 {offsets = [8, 0, 0], sizes = [1, 8, 1], strides = [1, 1, 1]} : vector<9x8x1xf32> to vector<1x8x1xf32>
    %49 = vector.shape_cast %48 : vector<1x8x1xf32> to vector<8x1xf32>
    %50 = vector.broadcast %49 : vector<8x1xf32> to vector<8x256xf32>
    %51 = arith.mulf %9, %50 : vector<8x256xf32>
    %52 = arith.addf %47, %51 : vector<8x256xf32>
    %c0_13 = arith.constant 0 : index
    %c0_14 = arith.constant 0 : index
    %53 = vector.load %arg5[%c0_13, %c0_14] : memref<1x256xf32, #tpu.memory_space<vmem>>, vector<1x256xf32>
    %c1_i32 = arith.constant 1 : i32
    %54 = tpu.dynamic_rotate %24 by %c1_i32 dim 1 : vector<8x256xf32>, i32 -> vector<8x256xf32>
    %55 = vector.broadcast %53 : vector<1x256xf32> to vector<8x256xf32>
    %56 = arith.mulf %55, %54 : vector<8x256xf32>
    %57 = arith.addf %38, %56 : vector<8x256xf32>
    %c0_15 = arith.constant 0 : index
    %c0_16 = arith.constant 0 : index
    %58 = vector.load %arg6[%c0_15, %c0_16] : memref<1x256xf32, #tpu.memory_space<vmem>>, vector<1x256xf32>
    %c255_i32 = arith.constant 255 : i32
    %59 = tpu.dynamic_rotate %52 by %c255_i32 dim 1 : vector<8x256xf32>, i32 -> vector<8x256xf32>
    %60 = vector.broadcast %58 : vector<1x256xf32> to vector<8x256xf32>
    %61 = arith.mulf %60, %59 : vector<8x256xf32>
    %62 = arith.addf %57, %61 : vector<8x256xf32>
    %c0_17 = arith.constant 0 : index
    %c0_18 = arith.constant 0 : index
    %63 = vector.load %arg8[%c0_17, %c0_18] : memref<8x1xf32, #tpu.memory_space<vmem>>, vector<8x1xf32>
    %64 = vector.broadcast %63 : vector<8x1xf32> to vector<8x256xf32>
    %65 = arith.addf %62, %64 : vector<8x256xf32>
    %cst = arith.constant 5.000000e-01 : f32
    %66 = vector.broadcast %cst : f32 to vector<8x256xf32>
    %67 = arith.mulf %66, %65 : vector<8x256xf32>
    %68 = arith.mulf %65, %65 : vector<8x256xf32>
    %69 = arith.mulf %68, %65 : vector<8x256xf32>
    %cst_19 = arith.constant 4.471500e-02 : f32
    %70 = vector.broadcast %cst_19 : f32 to vector<8x256xf32>
    %71 = arith.mulf %70, %69 : vector<8x256xf32>
    %72 = arith.addf %65, %71 : vector<8x256xf32>
    %cst_20 = arith.constant 0.797884583 : f32
    %73 = vector.broadcast %cst_20 : f32 to vector<8x256xf32>
    %74 = arith.mulf %73, %72 : vector<8x256xf32>
    %75 = math.tanh %74 : vector<8x256xf32>
    %cst_21 = arith.constant 1.000000e+00 : f32
    %76 = vector.broadcast %cst_21 : f32 to vector<8x256xf32>
    %77 = arith.addf %76, %75 : vector<8x256xf32>
    %78 = arith.mulf %67, %77 : vector<8x256xf32>
    %c0_22 = arith.constant 0 : index
    %c0_23 = arith.constant 0 : index
    %79 = vector.load %arg9[%c0_22, %c0_23] : memref<16x8xf32, #tpu.memory_space<vmem>>, vector<16x8xf32>
    %cst_24 = arith.constant dense<0.000000e+00> : vector<16x256xf32>
    %80 = tpu.matmul %79, %78, %cst_24 {dimension_numbers = #tpu.dot_dimension_numbers<[1], [0], [0], [1], [0, 0, 1, 1], [], []>} : vector<16x8xf32>, vector<8x256xf32>, vector<16x256xf32> -> vector<16x256xf32>
    %c0_25 = arith.constant 0 : index
    %c0_26 = arith.constant 0 : index
    %81 = vector.load %arg10[%c0_25, %c0_26] : memref<16x1xf32, #tpu.memory_space<vmem>>, vector<16x1xf32>
    %82 = vector.broadcast %81 : vector<16x1xf32> to vector<16x256xf32>
    %83 = arith.addf %80, %82 : vector<16x256xf32>
    %cst_27 = arith.constant 5.000000e-01 : f32
    %84 = vector.broadcast %cst_27 : f32 to vector<16x256xf32>
    %85 = arith.mulf %84, %83 : vector<16x256xf32>
    %86 = arith.mulf %83, %83 : vector<16x256xf32>
    %87 = arith.mulf %86, %83 : vector<16x256xf32>
    %cst_28 = arith.constant 4.471500e-02 : f32
    %88 = vector.broadcast %cst_28 : f32 to vector<16x256xf32>
    %89 = arith.mulf %88, %87 : vector<16x256xf32>
    %90 = arith.addf %83, %89 : vector<16x256xf32>
    %cst_29 = arith.constant 0.797884583 : f32
    %91 = vector.broadcast %cst_29 : f32 to vector<16x256xf32>
    %92 = arith.mulf %91, %90 : vector<16x256xf32>
    %93 = math.tanh %92 : vector<16x256xf32>
    %cst_30 = arith.constant 1.000000e+00 : f32
    %94 = vector.broadcast %cst_30 : f32 to vector<16x256xf32>
    %95 = arith.addf %94, %93 : vector<16x256xf32>
    %96 = arith.mulf %85, %95 : vector<16x256xf32>
    %c0_31 = arith.constant 0 : index
    %c0_32 = arith.constant 0 : index
    %c0_33 = arith.constant 0 : index
    %97 = vector.load %arg11[%c0_31, %c0_32, %c0_33] : memref<1x16x256xf32, #tpu.memory_space<vmem>>, vector<1x16x256xf32>
    %98 = vector.shape_cast %97 : vector<1x16x256xf32> to vector<16x256xf32>
    %99 = vector.shape_cast %96 : vector<16x256xf32> to vector<1x16x256xf32>
    tpu.vector_store %arg11[%c0_31, %c0_32, %c0_33], %99 {strides = array<i32>} : memref<1x16x256xf32, #tpu.memory_space<vmem>>, vector<1x16x256xf32>,
    return
  }
  func.func @transform_0(%arg0: i32, %arg1: i32) -> (i32, i32, i32) {
    %c0_i32 = arith.constant 0 : i32
    %c0_i32_0 = arith.constant 0 : i32
    return %arg0, %c0_i32, %arg1 : i32, i32, i32
  }
  func.func @transform_1(%arg0: i32, %arg1: i32) -> (i32, i32, i32, i32) {
    %c0_i32 = arith.constant 0 : i32
    %c0_i32_0 = arith.constant 0 : i32
    %c0_i32_1 = arith.constant 0 : i32
    return %arg0, %arg1, %c0_i32, %c0_i32_0 : i32, i32, i32, i32
  }
  func.func @transform_2(%arg0: i32, %arg1: i32) -> (i32, i32, i32, i32) {
    %c0_i32 = arith.constant 0 : i32
    %c0_i32_0 = arith.constant 0 : i32
    %c0_i32_1 = arith.constant 0 : i32
    return %arg0, %arg1, %c0_i32, %c0_i32_0 : i32, i32, i32, i32
  }
  func.func @transform_3(%arg0: i32, %arg1: i32) -> (i32, i32) {
    %c0_i32 = arith.constant 0 : i32
    %c0_i32_0 = arith.constant 0 : i32
    %c0_i32_1 = arith.constant 0 : i32
    return %c0_i32, %c0_i32_0 : i32, i32
  }
  func.func @transform_4(%arg0: i32, %arg1: i32) -> (i32, i32) {
    %c0_i32 = arith.constant 0 : i32
    %c0_i32_0 = arith.constant 0 : i32
    %c0_i32_1 = arith.constant 0 : i32
    return %c0_i32, %c0_i32_0 : i32, i32
  }
  func.func @transform_5(%arg0: i32, %arg1: i32) -> (i32, i32, i32) {
    %c0_i32 = arith.constant 0 : i32
    %c0_i32_0 = arith.constant 0 : i32
    %c0_i32_1 = arith.constant 0 : i32
    %c0_i32_2 = arith.constant 0 : i32
    return %c0_i32, %c0_i32_0, %c0_i32_1 : i32, i32, i32
  }
  func.func @transform_6(%arg0: i32, %arg1: i32) -> (i32, i32) {
    %c0_i32 = arith.constant 0 : i32
    %c0_i32_0 = arith.constant 0 : i32
    %c0_i32_1 = arith.constant 0 : i32
    return %c0_i32, %c0_i32_0 : i32, i32
  }
  func.func @transform_7(%arg0: i32, %arg1: i32) -> (i32, i32) {
    %c0_i32 = arith.constant 0 : i32
    %c0_i32_0 = arith.constant 0 : i32
    %c0_i32_1 = arith.constant 0 : i32
    return %c0_i32, %c0_i32_0 : i32, i32
  }
  func.func @transform_8(%arg0: i32, %arg1: i32) -> (i32, i32) {
    %c0_i32 = arith.constant 0 : i32
    %c0_i32_0 = arith.constant 0 : i32
    %c0_i32_1 = arith.constant 0 : i32
    return %c0_i32, %c0_i32_0 : i32, i32
  }
  func.func @transform_9(%arg0: i32, %arg1: i32) -> (i32, i32, i32) {
    %c0_i32 = arith.constant 0 : i32
    %c0_i32_0 = arith.constant 0 : i32
    return %arg0, %c0_i32, %arg1 : i32, i32, i32
  }
}

</mosaic_0001>

<llo_original>
// kernel: tpu_custom_call.1
$region0: #{tpu_custom_call.1}
  #allocation0 [shape = 'u32[]', space=smem, size = 0x4, offset = 0x4, fixed_abs, tag = 'smem constant byte address 0x4 - core index']
  #allocation1 [shape = 'u32[144,128]{1,0:T(1,128)}', space=vmem, size = 0x12000, scoped, tag = 'internal scratch']
  %s0 = inlined_call_operand.vmem [shape: f32[2,8,1024], index: 0, kind: input, shape index: {}]
  %s1 = inlined_call_operand.hbm [shape: f32[2,4,8,32], index: 1, kind: input, shape index: {}]
  %s2 = inlined_call_operand.hbm [shape: f32[2,4,8,32], index: 2, kind: input, shape index: {}]
  %s3 = inlined_call_operand.hbm [shape: f32[1,256], index: 3, kind: input, shape index: {}]
  %s4 = inlined_call_operand.hbm [shape: f32[1,256], index: 4, kind: input, shape index: {}]
  %s5 = inlined_call_operand.vmem [shape: f32[9,8,1], index: 5, kind: input, shape index: {}]
  %s6 = inlined_call_operand.vmem [shape: f32[8,1], index: 6, kind: input, shape index: {}]
  %s7 = inlined_call_operand.vmem [shape: f32[16,8], index: 7, kind: input, shape index: {}]
  %s8 = inlined_call_operand.vmem [shape: f32[16,1], index: 8, kind: input, shape index: {}]
  %s9 = inlined_call_operand.hbm [shape: f32[2,16,1024], index: 9, kind: output, shape index: {}]
  %s10 = sld [smem:[#allocation0]]
  $region85: #{tpu_custom_call.1} parent=0
    _
  %s12 = ssub.s32 1, %s10
  %s13 = scalar_select 0, %s12, %s10
  $region1: #{tpu_custom_call.1} parent=0
    #allocation2 [shape = 'u8[8192]{0}', space=vmem, size = 0x2000, scoped, tag = 'input window, operand 1']
    #allocation3 [shape = 's32[2]{0}', space=sflag, size = 0x8, scoped, tag = 'scoped memory for tpu_custom_call.1']
    #allocation4 [shape = 's32[2]{0}', space=sflag, size = 0x8, scoped, tag = 'scoped memory for tpu_custom_call.1']
    #allocation5 [shape = 'u8[8192]{0}', space=vmem, size = 0x2000, scoped, tag = 'input window, operand 2']
    #allocation6 [shape = 's32[2]{0}', space=sflag, size = 0x8, scoped, tag = 'scoped memory for tpu_custom_call.1']
    #allocation7 [shape = 'u8[1024]{0}', space=vmem, size = 0x400, scoped, tag = 'input window, operand 3, single buffered']
    #allocation8 [shape = 'u8[1024]{0}', space=vmem, size = 0x400, scoped, tag = 'input window, operand 4, single buffered']
    #allocation9 [shape = 's32[1]{0}', space=sflag, size = 0x4, scoped, tag = 'scoped memory for tpu_custom_call.1']
    #allocation10 [shape = 'u8[32768]{0}', space=vmem, size = 0x8000, scoped, tag = 'output window, operand 0']
    %14 = vsyncpa [#allocation3], 0
    %s15 = scalar_lea.sflag [#allocation3], 1
    %16 = vsyncpa %s15, 0
    %17 = vsyncpa [#allocation6], 0
    %s18 = scalar_lea.sflag [#allocation6], 1
    %19 = vsyncpa %s18, 0
    %20 = vsyncpa [#allocation9], 0
    %21 = vsyncpa [#allocation4], 0
    %s22 = scalar_lea.sflag [#allocation4], 1
    %23 = vsyncpa %s22, 0
    loop: start=0, step=1, limit=10
    $region2: #{tpu_custom_call.1} parent=1 // loop_pre_header
      _
    $region3: #{tpu_custom_call.1} parent=1 // loop_header
      %s25 = sphi 0, %s29
      %p26 = scmp.ge.s32.totalorder %s25, 10
      %s32 = sphi 0, %s44
      %s33 = sphi 0, %s40
      %s34 = sphi 0, %s32
      %s35 = sphi 0, %s33
      %s36 = sphi 0, %s34
      %s37 = sphi 0, %s35
      %s49 = sphi 0, %s51
      %s52 = sphi 0, %s49
      %s53 = sphi 0, %s52
      %s69 = sphi 0, %s53
      %s77 = sphi 0, %s79
      %s80 = sphi 0, %s77
      %s81 = sphi 0, %s80
      %s97 = sphi 0, %s81
      %s105 = sphi 0, %s107
      %s108 = sphi 0, %s105
      %s109 = sphi 0, %s108
      %s125 = sphi 0, %s109
      %s129 = sphi 0, %s129
      %s131 = sphi 0, %s129
      %s132 = sphi 0, %s131
      %s146 = sphi 0, %s132
      %s150 = sphi 0, %s150
      %s152 = sphi 0, %s150
      %s153 = sphi 0, %s152
      %s167 = sphi 0, %s153
      %s171 = sphi 0, %s171
      %s173 = sphi 0, %s171
      %s174 = sphi 0, %s173
      %s188 = sphi 0, %s174
      %s192 = sphi 0, %s192
      %s194 = sphi 0, %s192
      %s195 = sphi 0, %s194
      %s209 = sphi 0, %s195
      %s213 = sphi 0, %s213
      %s215 = sphi 0, %s213
      %s216 = sphi 0, %s215
      %s230 = sphi 0, %s216
      %s234 = sphi 0, %s234
      %s236 = sphi 0, %s234
      %s237 = sphi 0, %s236
      %s251 = sphi 0, %s237
      %s259 = sphi 0, %s261
      %s262 = sphi 0, %s259
      %s263 = sphi 0, %s262
      %s279 = sphi 0, %s263
    $region4: #{tpu_custom_call.1} parent=1 // loop_header_branch
      %28 = sbr.rel (%p26) target = $region8
    $region5: #{tpu_custom_call.1} parent=1 // loop_body
      %s30 = ssub.s32 %s25, 1
      %s31 = ssub.s32 %s25, 2
      %s38 = sadd.s32 1, %s33
      %p39 = scmp.ge.s32.totalorder %s38, 4
      %s40 = scalar_select %p39, 0, %s38
      %s41 = sadd.s32 1, %s32
      %s42 = scalar_select %p39, %s41, %s32
      %p43 = scmp.ge.s32.totalorder %s42, 2
      %s44 = scalar_select %p43, 0, %s42
      %s45 = ssub.s32 %s32, %s44
      %s46 = ssub.s32 %s33, %s40
      %s47 = sor.u32 %s45, %s46
      %p48 = scmp.eq.s32.totalorder %s47, 0
      %s50 = sadd.s32 %s49, 1
      %s51 = scalar_select %p48, %s49, %s50
      %p54 = pneg %p48
      %p55 = scmp.eq.s32.totalorder %s25, 7
      %p56 = por %p54, %p55
      %p57 = scmp.ne.s32.totalorder %s49, %s52
      %p58 = scmp.eq.s32.totalorder %s25, 0
      %p59 = por %p57, %p58
      %p60 = scmp.ne.s32.totalorder %s49, %s52
      %p61 = scmp.eq.s32.totalorder %s30, 7
      %p62 = por %p60, %p61
      %p63 = scmp.ne.s32.totalorder %s52, %s53
      %p64 = scmp.eq.s32.totalorder %s30, 0
      %p65 = por %p63, %p64
      %p66 = scmp.ne.s32.totalorder %s52, %s53
      %p67 = scmp.eq.s32.totalorder %s31, 7
      %p68 = por %p66, %p67
      %p70 = scmp.ne.s32.totalorder %s53, %s69
      %p71 = scmp.eq.s32.totalorder %s31, 0
      %p72 = por %p70, %p71
      %s73 = ssub.s32 %s32, %s44
      %s74 = ssub.s32 %s33, %s40
      %s75 = sor.u32 %s73, %s74
      %p76 = scmp.eq.s32.totalorder %s75, 0
      %s78 = sadd.s32 %s77, 1
      %s79 = scalar_select %p76, %s77, %s78
      %p82 = pneg %p76
      %p83 = scmp.eq.s32.totalorder %s25, 7
      %p84 = por %p82, %p83
      %p85 = scmp.ne.s32.totalorder %s77, %s80
      %p86 = scmp.eq.s32.totalorder %s25, 0
      %p87 = por %p85, %p86
      %p88 = scmp.ne.s32.totalorder %s77, %s80
      %p89 = scmp.eq.s32.totalorder %s30, 7
      %p90 = por %p88, %p89
      %p91 = scmp.ne.s32.totalorder %s80, %s81
      %p92 = scmp.eq.s32.totalorder %s30, 0
      %p93 = por %p91, %p92
      %p94 = scmp.ne.s32.totalorder %s80, %s81
      %p95 = scmp.eq.s32.totalorder %s31, 7
      %p96 = por %p94, %p95
      %p98 = scmp.ne.s32.totalorder %s81, %s97
      %p99 = scmp.eq.s32.totalorder %s31, 0
      %p100 = por %p98, %p99
      %s101 = ssub.s32 %s32, %s44
      %s102 = ssub.s32 %s33, %s40
      %s103 = sor.u32 %s101, %s102
      %p104 = scmp.eq.s32.totalorder %s103, 0
      %s106 = sadd.s32 %s105, 1
      %s107 = scalar_select %p104, %s105, %s106
      %p110 = pneg %p104
      %p111 = scmp.eq.s32.totalorder %s25, 7
      %p112 = por %p110, %p111
      %p113 = scmp.ne.s32.totalorder %s105, %s108
      %p114 = scmp.eq.s32.totalorder %s25, 0
      %p115 = por %p113, %p114
      %p116 = scmp.ne.s32.totalorder %s105, %s108
      %p117 = scmp.eq.s32.totalorder %s30, 7
      %p118 = por %p116, %p117
      %p119 = scmp.ne.s32.totalorder %s108, %s109
      %p120 = scmp.eq.s32.totalorder %s30, 0
      %p121 = por %p119, %p120
      %p122 = scmp.ne.s32.totalorder %s108, %s109
      %p123 = scmp.eq.s32.totalorder %s31, 7
      %p124 = por %p122, %p123
      %p126 = scmp.ne.s32.totalorder %s109, %s125
      %p127 = scmp.eq.s32.totalorder %s31, 0
      %p128 = por %p126, %p127
      %s130 = sadd.s32 %s129, 1
      %p133 = scmp.eq.s32.totalorder %s25, 7
      %p134 = scmp.ne.s32.totalorder %s129, %s131
      %p135 = scmp.eq.s32.totalorder %s25, 0
      %p136 = por %p134, %p135
      %p137 = scmp.ne.s32.totalorder %s129, %s131
      %p138 = scmp.eq.s32.totalorder %s30, 7
      %p139 = por %p137, %p138
      %p140 = scmp.ne.s32.totalorder %s131, %s132
      %p141 = scmp.eq.s32.totalorder %s30, 0
      %p142 = por %p140, %p141
      %p143 = scmp.ne.s32.totalorder %s131, %s132
      %p144 = scmp.eq.s32.totalorder %s31, 7
      %p145 = por %p143, %p144
      %p147 = scmp.ne.s32.totalorder %s132, %s146
      %p148 = scmp.eq.s32.totalorder %s31, 0
      %p149 = por %p147, %p148
      %s151 = sadd.s32 %s150, 1
      %p154 = scmp.eq.s32.totalorder %s25, 7
      %p155 = scmp.ne.s32.totalorder %s150, %s152
      %p156 = scmp.eq.s32.totalorder %s25, 0
      %p157 = por %p155, %p156
      %p158 = scmp.ne.s32.totalorder %s150, %s152
      %p159 = scmp.eq.s32.totalorder %s30, 7
      %p160 = por %p158, %p159
      %p161 = scmp.ne.s32.totalorder %s152, %s153
      %p162 = scmp.eq.s32.totalorder %s30, 0
      %p163 = por %p161, %p162
      %p164 = scmp.ne.s32.totalorder %s152, %s153
      %p165 = scmp.eq.s32.totalorder %s31, 7
      %p166 = por %p164, %p165
      %p168 = scmp.ne.s32.totalorder %s153, %s167
      %p169 = scmp.eq.s32.totalorder %s31, 0
      %p170 = por %p168, %p169
      %s172 = sadd.s32 %s171, 1
      %p175 = scmp.eq.s32.totalorder %s25, 7
      %p176 = scmp.ne.s32.totalorder %s171, %s173
      %p177 = scmp.eq.s32.totalorder %s25, 0
      %p178 = por %p176, %p177
      %p179 = scmp.ne.s32.totalorder %s171, %s173
      %p180 = scmp.eq.s32.totalorder %s30, 7
      %p181 = por %p179, %p180
      %p182 = scmp.ne.s32.totalorder %s173, %s174
      %p183 = scmp.eq.s32.totalorder %s30, 0
      %p184 = por %p182, %p183
      %p185 = scmp.ne.s32.totalorder %s173, %s174
      %p186 = scmp.eq.s32.totalorder %s31, 7
      %p187 = por %p185, %p186
      %p189 = scmp.ne.s32.totalorder %s174, %s188
      %p190 = scmp.eq.s32.totalorder %s31, 0
      %p191 = por %p189, %p190
      %s193 = sadd.s32 %s192, 1
      %p196 = scmp.eq.s32.totalorder %s25, 7
      %p197 = scmp.ne.s32.totalorder %s192, %s194
      %p198 = scmp.eq.s32.totalorder %s25, 0
      %p199 = por %p197, %p198
      %p200 = scmp.ne.s32.totalorder %s192, %s194
      %p201 = scmp.eq.s32.totalorder %s30, 7
      %p202 = por %p200, %p201
      %p203 = scmp.ne.s32.totalorder %s194, %s195
      %p204 = scmp.eq.s32.totalorder %s30, 0
      %p205 = por %p203, %p204
      %p206 = scmp.ne.s32.totalorder %s194, %s195
      %p207 = scmp.eq.s32.totalorder %s31, 7
      %p208 = por %p206, %p207
      %p210 = scmp.ne.s32.totalorder %s195, %s209
      %p211 = scmp.eq.s32.totalorder %s31, 0
      %p212 = por %p210, %p211
      %s214 = sadd.s32 %s213, 1
      %p217 = scmp.eq.s32.totalorder %s25, 7
      %p218 = scmp.ne.s32.totalorder %s213, %s215
      %p219 = scmp.eq.s32.totalorder %s25, 0
      %p220 = por %p218, %p219
      %p221 = scmp.ne.s32.totalorder %s213, %s215
      %p222 = scmp.eq.s32.totalorder %s30, 7
      %p223 = por %p221, %p222
      %p224 = scmp.ne.s32.totalorder %s215, %s216
      %p225 = scmp.eq.s32.totalorder %s30, 0
      %p226 = por %p224, %p225
      %p227 = scmp.ne.s32.totalorder %s215, %s216
      %p228 = scmp.eq.s32.totalorder %s31, 7
      %p229 = por %p227, %p228
      %p231 = scmp.ne.s32.totalorder %s216, %s230
      %p232 = scmp.eq.s32.totalorder %s31, 0
      %p233 = por %p231, %p232
      %s235 = sadd.s32 %s234, 1
      %p238 = scmp.eq.s32.totalorder %s25, 7
      %p239 = scmp.ne.s32.totalorder %s234, %s236
      %p240 = scmp.eq.s32.totalorder %s25, 0
      %p241 = por %p239, %p240
      %p242 = scmp.ne.s32.totalorder %s234, %s236
      %p243 = scmp.eq.s32.totalorder %s30, 7
      %p244 = por %p242, %p243
      %p245 = scmp.ne.s32.totalorder %s236, %s237
      %p246 = scmp.eq.s32.totalorder %s30, 0
      %p247 = por %p245, %p246
      %p248 = scmp.ne.s32.totalorder %s236, %s237
      %p249 = scmp.eq.s32.totalorder %s31, 7
      %p250 = por %p248, %p249
      %p252 = scmp.ne.s32.totalorder %s237, %s251
      %p253 = scmp.eq.s32.totalorder %s31, 0
      %p254 = por %p252, %p253
      %s255 = ssub.s32 %s32, %s44
      %s256 = ssub.s32 %s33, %s40
      %s257 = sor.u32 %s255, %s256
      %p258 = scmp.eq.s32.totalorder %s257, 0
      %s260 = sadd.s32 %s259, 1
      %s261 = scalar_select %p258, %s259, %s260
      %p264 = pneg %p258
      %p265 = scmp.eq.s32.totalorder %s25, 7
      %p266 = por %p264, %p265
      %p267 = scmp.ne.s32.totalorder %s259, %s262
      %p268 = scmp.eq.s32.totalorder %s25, 0
      %p269 = por %p267, %p268
      %p270 = scmp.ne.s32.totalorder %s259, %s262
      %p271 = scmp.eq.s32.totalorder %s30, 7
      %p272 = por %p270, %p271
      %p273 = scmp.ne.s32.totalorder %s262, %s263
      %p274 = scmp.eq.s32.totalorder %s30, 0
      %p275 = por %p273, %p274
      %p276 = scmp.ne.s32.totalorder %s262, %s263
      %p277 = scmp.eq.s32.totalorder %s31, 7
      %p278 = por %p276, %p277
      %p280 = scmp.ne.s32.totalorder %s263, %s279
      %p281 = scmp.eq.s32.totalorder %s31, 0
      %p282 = por %p280, %p281
      %p283 = scmp.le.s32.totalorder 1, %s25
      %p284 = scmp.lt.s32.totalorder %s25, 9
      %p285 = pnand %p283, %p284
      %p286 = pneg %p285
      // Predicated region
      $region9: #{tpu_custom_call.1} parent=5 // pred_check
        _
      $region10: #{tpu_custom_call.1} parent=5 // pred_check_branch
        %288 = sbr.rel (%p285) target = $region12
      $region11: #{tpu_custom_call.1} parent=5 // pred_region
        %s289 = ssub.s32 %s25, 1
        // Predicated region
        $region13: #{tpu_custom_call.1} parent=11 // pred_check
          %p290 = pneg %p142
        $region14: #{tpu_custom_call.1} parent=11 // pred_check_branch
          %292 = sbr.rel (%p290) target = $region16
        $region15: #{tpu_custom_call.1} parent=11 // pred_region
          %s294 = ssub.s32 32, 32
          %295 = vsyncadd [#allocation6], %s294
          %s297 = sshll.u32 [#allocation7], 4
          %s298 = int_to_ptr.vmem [resolvable:$true] %s297
          %300 = dma.hbm_to_vmem [thread:$0]  %s3, 32, %s298, [#allocation6]
        $region16: #{tpu_custom_call.1} parent=11 // pred_fallthru
          _
        // Predicated region
        $region17: #{tpu_custom_call.1} parent=11 // pred_check
          %p301 = pneg %p163
        $region18: #{tpu_custom_call.1} parent=11 // pred_check_branch
          %303 = sbr.rel (%p301) target = $region20
        $region19: #{tpu_custom_call.1} parent=11 // pred_region
          %s305 = ssub.s32 32, 32
          %306 = vsyncadd [#allocation9], %s305
          %s308 = sshll.u32 [#allocation8], 4
          %s309 = int_to_ptr.vmem [resolvable:$true] %s308
          %311 = dma.hbm_to_vmem [thread:$0]  %s4, 32, %s309, [#allocation9]
        $region20: #{tpu_custom_call.1} parent=11 // pred_fallthru
          _
        // Predicated region
        $region21: #{tpu_custom_call.1} parent=11 // pred_check
          %p312 = pneg %p184
        $region22: #{tpu_custom_call.1} parent=11 // pred_check_branch
          %314 = sbr.rel (%p312) target = $region24
        $region23: #{tpu_custom_call.1} parent=11 // pred_region
          _
        $region24: #{tpu_custom_call.1} parent=11 // pred_fallthru
          _
        // Predicated region
        $region25: #{tpu_custom_call.1} parent=11 // pred_check
          %p315 = pneg %p205
        $region26: #{tpu_custom_call.1} parent=11 // pred_check_branch
          %317 = sbr.rel (%p315) target = $region28
        $region27: #{tpu_custom_call.1} parent=11 // pred_region
          _
        $region28: #{tpu_custom_call.1} parent=11 // pred_fallthru
          _
        // Predicated region
        $region29: #{tpu_custom_call.1} parent=11 // pred_check
          %p318 = pneg %p226
        $region30: #{tpu_custom_call.1} parent=11 // pred_check_branch
          %320 = sbr.rel (%p318) target = $region32
        $region31: #{tpu_custom_call.1} parent=11 // pred_region
          _
        $region32: #{tpu_custom_call.1} parent=11 // pred_fallthru
          _
        // Predicated region
        $region33: #{tpu_custom_call.1} parent=11 // pred_check
          %p321 = pneg %p247
        $region34: #{tpu_custom_call.1} parent=11 // pred_check_branch
          %323 = sbr.rel (%p321) target = $region36
        $region35: #{tpu_custom_call.1} parent=11 // pred_region
          _
        $region36: #{tpu_custom_call.1} parent=11 // pred_fallthru
          _
      $region12: #{tpu_custom_call.1} parent=5 // pred_fallthru
        _
      %p324 = scmp.lt.s32.totalorder %s25, 8
      // Predicated region
      $region37: #{tpu_custom_call.1} parent=5 // pred_check
        %p325 = pneg %p324
      $region38: #{tpu_custom_call.1} parent=5 // pred_check_branch
        %327 = sbr.rel (%p325) target = $region40
      $region39: #{tpu_custom_call.1} parent=5 // pred_region
        // Predicated region
        $region41: #{tpu_custom_call.1} parent=39 // pred_check
          %p328 = pneg %p59
        $region42: #{tpu_custom_call.1} parent=39 // pred_check_branch
          %330 = sbr.rel (%p328) target = $region44
        $region43: #{tpu_custom_call.1} parent=39 // pred_region
          %s331 = smul.u32 2, %s33
          %p332 = scmp.lt.s32.totalorder %s32, 1
          %s333 = scalar_select %p332, %s32, 1
          %p334 = scmp.lt.s32.totalorder %s331, 7
          %s335 = scalar_select %p334, %s331, 7
          %s336 = smul.addr %s333, 8
          %s337 = sadd.s32 %s335, %s336
          %s338 = smul.addr %s337, 8
          %s339 = scalar_lea.vmem %s0, %s338
          %s340 = smul.u32 2, %s33
        $region44: #{tpu_custom_call.1} parent=39 // pred_fallthru
          _
        // Predicated region
        $region45: #{tpu_custom_call.1} parent=39 // pred_check
          %p341 = pneg %p87
        $region46: #{tpu_custom_call.1} parent=39 // pred_check_branch
          %343 = sbr.rel (%p341) target = $region48
        $region47: #{tpu_custom_call.1} parent=39 // pred_region
          %s344 = sand.u32 %s77, 1
          %s345 = scalar_lea.sflag [#allocation3], %s344
          %s346 = sand.u32 %s77, 1
          %s347 = smul.addr %s346, 8
          %s348 = scalar_lea.vmem [#allocation2], %s347
          %s350 = ssub.s32 128, 128
          %351 = vsyncadd %s345, %s350
          %s352 = smul.addr %s32, 4
          %s353 = sadd.s32 %s33, %s352
          %s354 = smul.addr %s353, 128
          %s355 = scalar_lea.hbm %s1, %s354
          %s357 = sshll.u32 %s348, 4
          %s358 = int_to_ptr.vmem [resolvable:$true] %s357
          %360 = dma.hbm_to_vmem [thread:$0]  %s355, 128, %s358, %s345
        $region48: #{tpu_custom_call.1} parent=39 // pred_fallthru
          _
        // Predicated region
        $region49: #{tpu_custom_call.1} parent=39 // pred_check
          %p361 = pneg %p115
        $region50: #{tpu_custom_call.1} parent=39 // pred_check_branch
          %363 = sbr.rel (%p361) target = $region52
        $region51: #{tpu_custom_call.1} parent=39 // pred_region
          %s364 = sand.u32 %s25, 1
          %s365 = scalar_lea.sflag [#allocation6], %s364
          %s366 = sand.u32 %s105, 1
          %s367 = smul.addr %s366, 8
          %s368 = scalar_lea.vmem [#allocation5], %s367
          %s370 = ssub.s32 128, 128
          %371 = vsyncadd %s365, %s370
          %s372 = smul.addr %s32, 4
          %s373 = sadd.s32 %s33, %s372
          %s374 = smul.addr %s373, 128
          %s375 = scalar_lea.hbm %s2, %s374
          %s377 = sshll.u32 %s368, 4
          %s378 = int_to_ptr.vmem [resolvable:$true] %s377
          %380 = dma.hbm_to_vmem [thread:$0]  %s375, 128, %s378, %s365
        $region52: #{tpu_custom_call.1} parent=39 // pred_fallthru
          _
      $region40: #{tpu_custom_call.1} parent=5 // pred_fallthru
        _
      %p381 = scmp.le.s32.totalorder 1, %s25
      %p382 = scmp.lt.s32.totalorder %s25, 9
      %p383 = pnand %p381, %p382
      %p384 = pneg %p383
      // Predicated region
      $region53: #{tpu_custom_call.1} parent=5 // pred_check
        _
      $region54: #{tpu_custom_call.1} parent=5 // pred_check_branch
        %386 = sbr.rel (%p383) target = $region56
      $region55: #{tpu_custom_call.1} parent=5 // pred_region
        %s387 = ssub.s32 %s25, 1
        %s388 = sand.u32 %s80, 1
        %s389 = scalar_lea.sflag [#allocation3], %s388
        %s390 = sand.u32 %s80, 1
        %s391 = smul.addr %s390, 8
        %s392 = scalar_lea.vmem [#allocation2], %s391
        // Predicated region
        $region57: #{tpu_custom_call.1} parent=55 // pred_check
          %p393 = pneg %p93
        $region58: #{tpu_custom_call.1} parent=55 // pred_check_branch
          %395 = sbr.rel (%p393) target = $region60
        $region59: #{tpu_custom_call.1} parent=55 // pred_region
          %396 = dma.done %s389, 128
        $region60: #{tpu_custom_call.1} parent=55 // pred_fallthru
          _
        %s397 = sand.u32 %s30, 1
        %s398 = scalar_lea.sflag [#allocation6], %s397
        %s399 = sand.u32 %s108, 1
        %s400 = smul.addr %s399, 8
        %s401 = scalar_lea.vmem [#allocation5], %s400
        // Predicated region
        $region61: #{tpu_custom_call.1} parent=55 // pred_check
          %p402 = pneg %p121
        $region62: #{tpu_custom_call.1} parent=55 // pred_check_branch
          %404 = sbr.rel (%p402) target = $region64
        $region63: #{tpu_custom_call.1} parent=55 // pred_region
          %405 = dma.done %s398, 128
        $region64: #{tpu_custom_call.1} parent=55 // pred_fallthru
          _
        // Predicated region
        $region65: #{tpu_custom_call.1} parent=55 // pred_check
          %p406 = pneg %p142
        $region66: #{tpu_custom_call.1} parent=55 // pred_check_branch
          %408 = sbr.rel (%p406) target = $region68
        $region67: #{tpu_custom_call.1} parent=55 // pred_region
          %409 = dma.done [#allocation6], 32
        $region68: #{tpu_custom_call.1} parent=55 // pred_fallthru
          _
        // Predicated region
        $region69: #{tpu_custom_call.1} parent=55 // pred_check
          %p410 = pneg %p163
        $region70: #{tpu_custom_call.1} parent=55 // pred_check_branch
          %412 = sbr.rel (%p410) target = $region72
        $region71: #{tpu_custom_call.1} parent=55 // pred_region
          %413 = dma.done [#allocation9], 32
        $region72: #{tpu_custom_call.1} parent=55 // pred_fallthru
          _
        %s414 = smul.u32 2, %s35
        %p415 = scmp.lt.s32.totalorder %s34, 1
        %s416 = scalar_select %p415, %s34, 1
        %p417 = scmp.lt.s32.totalorder %s414, 7
        %s418 = scalar_select %p417, %s414, 7
        %s419 = smul.addr %s416, 8
        %s420 = sadd.s32 %s418, %s419
        %s421 = smul.addr %s420, 8
        %s422 = scalar_lea.vmem %s0, %s421
        %p423 = pneg %p65
        %p424 = pneg %p62
        %s425 = sand.u32 %s80, 1
        %s426 = scalar_lea.sflag [#allocation3], %s425
        %s427 = sand.u32 %s80, 1
        %s428 = smul.addr %s427, 8
        %s429 = scalar_lea.vmem [#allocation2], %s428
        %p430 = pneg %p93
        %p431 = pneg %p90
        %s432 = sand.u32 %s30, 1
        %s433 = scalar_lea.sflag [#allocation6], %s432
        %s434 = sand.u32 %s108, 1
        %s435 = smul.addr %s434, 8
        %s436 = scalar_lea.vmem [#allocation5], %s435
        %p437 = pneg %p121
        %p438 = pneg %p118
        %p439 = pneg %p142
        %p440 = pneg %p139
        %p441 = pneg %p163
        %p442 = pneg %p160
        %p443 = pneg %p184
        %p444 = pneg %p181
        %p445 = pneg %p205
        %p446 = pneg %p202
        %p447 = pneg %p226
        %p448 = pneg %p223
        %p449 = pneg %p247
        %p450 = pneg %p244
        %p451 = pneg %p275
        %p452 = pneg %p272
        %s453 = sand.u32 %s262, 1
        %s454 = scalar_lea.sflag [#allocation4], %s453
        %s455 = sand.u32 %s262, 1
        %s456 = smul.addr %s455, 32
        %s457 = scalar_lea.vmem [#allocation10], %s456
        %s458 = smul.u32 2, %s35
        %p459 = scmp.lt.s32.totalorder %s34, 1
        %s460 = scalar_select %p459, %s34, 1
        %p461 = scmp.lt.s32.totalorder %s458, 7
        %s462 = scalar_select %p461, %s458, 7
        %s463 = smul.addr %s460, 8
        %s464 = sadd.s32 %s462, %s463
        %s465 = smul.addr %s464, 8
        %s466 = scalar_lea.vmem %s0, %s465
        %s467 = smul.u32 2, %s35
        %s468 = smul.u32 2, %s35
        %v469 = vld [vmem:[%s466] sm:$0xff]
        %v470 = vld [vmem:[%s466 + $0x8] sm:$0xff]
        %v471 = vld [vmem:[%s392] sm:$0xff]
        %v472 = vld [vmem:[%s401] sm:$0xff]
        %475 = vrot.lane.b32.xlu0 %v469, 32
        %v476 = vpop.permute.xlu0 %475
        %477 = vrot.lane.b32.xlu0 %v470, 32
        %v478 = vpop.permute.xlu0 %477
        %vm479 = vcmask 261120
        %v480 = vsel %vm479, %v476, %v478
        %v483 = vsel %vm479, %v471, %v476
        %484 = vrot.lane.b32.xlu0 %v469, 96
        %v485 = vpop.permute.xlu0 %484
        %486 = vrot.lane.b32.xlu0 %v470, 96
        %v487 = vpop.permute.xlu0 %486
        %vm488 = vcmask 785408
        %v489 = vsel %vm488, %v485, %v487
        %493 = vrot.lane.b32.xlu0 %v472, 96
        %v494 = vpop.permute.xlu0 %493
        %v496 = vsel %vm488, %v487, %v494
        %v497 = vld [vmem:[%s5] sm:$0xff]
        %v498 = vld [vmem:[%s5 + $0x8] sm:$0xff]
        %v499 = vld [vmem:[%s5 + $0x10] sm:$0xff]
        %v500 = vld [vmem:[%s5 + $0x18] sm:$0xff]
        %v501 = vld [vmem:[%s5 + $0x20] sm:$0xff]
        %v502 = vld [vmem:[%s5 + $0x28] sm:$0xff]
        %v503 = vld [vmem:[%s5 + $0x30] sm:$0xff]
        %v504 = vld [vmem:[%s5 + $0x38] sm:$0xff]
        %v505 = vld [vmem:[%s5 + $0x40] sm:$0xff]
        %507 = vset.pattern.permute.xlu0 0
        %508 = vperm.xlu0 %507, %v497
        %v509 = vpop.permute.xlu0 %508
        %v511 = vmul.f32 %v483, %v509
        %v512 = vmul.f32 %v480, %v509
        %514 = vset.pattern.permute.xlu0 0
        %515 = vperm.xlu0 %514, %v500
        %v516 = vpop.permute.xlu0 %515
        %v518 = vmul.f32 %v469, %v516
        %v519 = vmul.f32 %v470, %v516
        %v520 = vadd.f32 %v511, %v518
        %v521 = vadd.f32 %v512, %v519
        %523 = vset.pattern.permute.xlu0 0
        %524 = vperm.xlu0 %523, %v503
        %v525 = vpop.permute.xlu0 %524
        %v527 = vmul.f32 %v489, %v525
        %v528 = vmul.f32 %v496, %v525
        %v529 = vadd.f32 %v520, %v527
        %v530 = vadd.f32 %v521, %v528
        %532 = vset.pattern.permute.xlu0 0
        %533 = vperm.xlu0 %532, %v498
        %v534 = vpop.permute.xlu0 %533
        %v536 = vmul.f32 %v483, %v534
        %v537 = vmul.f32 %v480, %v534
        %539 = vset.pattern.permute.xlu0 0
        %540 = vperm.xlu0 %539, %v501
        %v541 = vpop.permute.xlu0 %540
        %v543 = vmul.f32 %v469, %v541
        %v544 = vmul.f32 %v470, %v541
        %v545 = vadd.f32 %v536, %v543
        %v546 = vadd.f32 %v537, %v544
        %548 = vset.pattern.permute.xlu0 0
        %549 = vperm.xlu0 %548, %v504
        %v550 = vpop.permute.xlu0 %549
        %v552 = vmul.f32 %v489, %v550
        %v553 = vmul.f32 %v496, %v550
        %v554 = vadd.f32 %v545, %v552
        %v555 = vadd.f32 %v546, %v553
        %557 = vset.pattern.permute.xlu0 0
        %558 = vperm.xlu0 %557, %v499
        %v559 = vpop.permute.xlu0 %558
        %v561 = vmul.f32 %v483, %v559
        %v562 = vmul.f32 %v480, %v559
        %564 = vset.pattern.permute.xlu0 0
        %565 = vperm.xlu0 %564, %v502
        %v566 = vpop.permute.xlu0 %565
        %v568 = vmul.f32 %v469, %v566
        %v569 = vmul.f32 %v470, %v566
        %v570 = vadd.f32 %v561, %v568
        %v571 = vadd.f32 %v562, %v569
        %573 = vset.pattern.permute.xlu0 0
        %574 = vperm.xlu0 %573, %v505
        %v575 = vpop.permute.xlu0 %574
        %v577 = vmul.f32 %v489, %v575
        %v578 = vmul.f32 %v496, %v575
        %v579 = vadd.f32 %v570, %v577
        %v580 = vadd.f32 %v571, %v578
        %v581 = vld [vmem:[#allocation7] sm:$0x3]
        %582 = vrot.lane.b32.xlu0 %v529, 1
        %v583 = vpop.permute.xlu0 %582
        %584 = vrot.lane.b32.xlu0 %v530, 1
        %v585 = vpop.permute.xlu0 %584
        %v586 = vlaneseq
        %v587 = vand.u32 %v586, 127
        %vm588 = vcmp.lt.s32.totalorder %v587, 1
        %v589 = vsel %vm588, %v583, %v585
        %v590 = vsel %vm588, %v585, %v583
        %v592 = vlaneseq
        %v593 = vshrl.u32 %v592, 7
        %v594 = vsub.s32 0, %v593
        %v595 = vrot.slane %v581, %v594
        %v596 = vlaneseq
        %v597 = vshrl.u32 %v596, 7
        %v598 = vsub.s32 1, %v597
        %v599 = vrot.slane %v581, %v598
        %v602 = vmul.f32 %v595, %v590
        %v603 = vmul.f32 %v599, %v589
        %v604 = vadd.f32 %v554, %v602
        %v605 = vadd.f32 %v555, %v603
        %v606 = vld [vmem:[#allocation8] sm:$0x3]
        %607 = vrot.lane.b32.xlu0 %v579, 127
        %v608 = vpop.permute.xlu0 %607
        %609 = vrot.lane.b32.xlu0 %v580, 127
        %v610 = vpop.permute.xlu0 %609
        %vm611 = vcmp.lt.s32.totalorder %v587, 127
        %v612 = vsel %vm611, %v608, %v610
        %v613 = vsel %vm611, %v610, %v608
        %v615 = vlaneseq
        %v616 = vshrl.u32 %v615, 7
        %v617 = vsub.s32 0, %v616
        %v618 = vrot.slane %v606, %v617
        %v619 = vlaneseq
        %v620 = vshrl.u32 %v619, 7
        %v621 = vsub.s32 1, %v620
        %v622 = vrot.slane %v606, %v621
        %v625 = vmul.f32 %v618, %v612
        %v626 = vmul.f32 %v622, %v613
        %v627 = vadd.f32 %v604, %v625
        %v628 = vadd.f32 %v605, %v626
        %v629 = vld [vmem:[%s6] sm:$0xff]
        %631 = vset.pattern.permute.xlu0 0
        %632 = vperm.xlu0 %631, %v629
        %v633 = vpop.permute.xlu0 %632
        %v635 = vadd.f32 %v627, %v633
        %v636 = vadd.f32 %v628, %v633
        %v637 = vmul.f32 %v635, 0.5
        %v638 = vmul.f32 %v636, 0.5
        %v639 = vmul.f32 %v635, %v635
        %v640 = vmul.f32 %v636, %v636
        %v641 = vmul.f32 %v639, %v635
        %v642 = vmul.f32 %v640, %v636
        %v643 = vmul.f32 %v641, 0.044715
        %v644 = vmul.f32 %v642, 0.044715
        %v645 = vadd.f32 %v635, %v643
        %v646 = vadd.f32 %v636, %v644
        %v647 = vmul.f32 %v645, 0.7978846
        %v648 = vmul.f32 %v646, 0.7978846
        %v649 = vtanh.pop %v647
        %v650 = vtanh.pop %v648
        %v651 = vadd.f32 %v649, 1.0
        %v652 = vadd.f32 %v650, 1.0
        %v653 = vmul.f32 %v637, %v651
        %v654 = vmul.f32 %v638, %v652
        %v655 = vld [vmem:[%s7] sm:$0xff]
        %v656 = vld [vmem:[%s7 + $0x8] sm:$0xff]
        %v657 = vld [vmem:[%s8] sm:$0xff]
        %v658 = vld [vmem:[%s8 + $0x8] sm:$0xff]
        %660 = vset.pattern.permute.xlu0 0
        %661 = vperm.xlu0 %660, %v657
        %v662 = vpop.permute.xlu0 %661
        %665 = vset.pattern.permute.xlu0 0
        %666 = vperm.xlu0 %665, %v658
        %v667 = vpop.permute.xlu0 %666
        %vm669 = vcmask 64512
        %v671 = vsel %vm669, %v655, 0
        %v674 = vsel %vm669, %v656, 0
        %676 = vmatprep.subr.mxu0 0.0
        %677 = vmatpush1.msra.mxu0 0.0
        %678 = vmatprep.subr.mxu0 0.0
        %679 = vmatpush1.msra.mxu0 0.0
        %680 = vmatprep.subr.mxu0 0.0
        %681 = vmatpush1.msra.mxu0 0.0
        %682 = vmatprep.subr.mxu0 0.0
        %683 = vmatpush1.msra.mxu0 0.0
        %684 = vmatprep.subr.mxu0 0.0
        %685 = vmatpush1.msra.mxu0 0.0
        %686 = vmatprep.subr.mxu0 0.0
        %687 = vmatpush1.msra.mxu0 0.0
        %688 = vmatprep.subr.mxu0 0.0
        %689 = vmatpush1.msra.mxu0 0.0
        %690 = vmatprep.subr.mxu0 0.0
        %691 = vmatpush1.msra.mxu0 0.0
        %692 = vmatprep.subr.mxu0 0.0
        %693 = vmatpush1.msra.mxu0 0.0
        %694 = vmatprep.subr.mxu0 0.0
        %695 = vmatpush1.msra.mxu0 0.0
        %696 = vmatprep.subr.mxu0 0.0
        %697 = vmatpush1.msra.mxu0 0.0
        %698 = vmatprep.subr.mxu0 0.0
        %699 = vmatpush1.msra.mxu0 0.0
        %700 = vmatprep.subr.mxu0 0.0
        %701 = vmatpush1.msra.mxu0 0.0
        %702 = vmatprep.subr.mxu0 0.0
        %703 = vmatpush1.msra.mxu0 0.0
        %704 = vmatprep.subr.mxu0 0.0
        %705 = vmatpush1.msra.mxu0 0.0
        %706 = vmatprep.subr.mxu0 %v654
        %707 = vmatpush1.msra.mxu0 %v653
        %708 = vmatprep.subr.mxu0 0.0
        %709 = vmatpush2.msra.mxu0 0.0
        %710 = vmatprep.subr.mxu0 0.0
        %711 = vmatpush2.msra.mxu0 0.0
        %712 = vmatprep.subr.mxu0 0.0
        %713 = vmatpush2.msra.mxu0 0.0
        %714 = vmatprep.subr.mxu0 0.0
        %715 = vmatpush2.msra.mxu0 0.0
        %716 = vmatprep.subr.mxu0 0.0
        %717 = vmatpush2.msra.mxu0 0.0
        %718 = vmatprep.subr.mxu0 0.0
        %719 = vmatpush2.msra.mxu0 0.0
        %720 = vmatprep.subr.mxu0 0.0
        %721 = vmatpush2.msra.mxu0 0.0
        %722 = vmatprep.subr.mxu0 0.0
        %723 = vmatpush2.msra.mxu0 0.0
        %724 = vmatprep.subr.mxu0 0.0
        %725 = vmatpush2.msra.mxu0 0.0
        %726 = vmatprep.subr.mxu0 0.0
        %727 = vmatpush2.msra.mxu0 0.0
        %728 = vmatprep.subr.mxu0 0.0
        %729 = vmatpush2.msra.mxu0 0.0
        %730 = vmatprep.subr.mxu0 0.0
        %731 = vmatpush2.msra.mxu0 0.0
        %732 = vmatprep.subr.mxu0 0.0
        %733 = vmatpush2.msra.mxu0 0.0
        %734 = vmatprep.subr.mxu0 0.0
        %735 = vmatpush2.msra.mxu0 0.0
        %736 = vmatprep.subr.mxu0 0.0
        %737 = vmatpush2.msra.mxu0 0.0
        %738 = vmatprep.subr.mxu0 0.0
        %739 = vmatpush2.msra.mxu0 0.0
        %740 = vmatprep.mubr.f32.mxu0 0.0
        %741 = vmatmul.mubr.f32.gmra.mxu0 %v671
        %v742 = vpop.f32.mrf.mxu0
        %v743 = vadd.f32 %v662, %v742
        %v744 = vpop.f32.mrf.mxu0
        %v745 = vadd.f32 %v662, %v744
        %746 = vmatprep.mubr.f32.mxu0 0.0
        %747 = vmatmul.mubr.f32.gmra.mxu0 %v674
        %v748 = vpop.f32.mrf.mxu0
        %v749 = vadd.f32 %v667, %v748
        %v750 = vpop.f32.mrf.mxu0
        %v751 = vadd.f32 %v667, %v750
        %752 = vdwg.mxu0
        %v753 = vmul.f32 %v743, 0.5
        %v754 = vmul.f32 %v745, 0.5
        %v755 = vmul.f32 %v749, 0.5
        %v756 = vmul.f32 %v751, 0.5
        %v757 = vmul.f32 %v743, %v743
        %v758 = vmul.f32 %v745, %v745
        %v759 = vmul.f32 %v749, %v749
        %v760 = vmul.f32 %v751, %v751
        %v761 = vmul.f32 %v757, %v743
        %v762 = vmul.f32 %v758, %v745
        %v763 = vmul.f32 %v759, %v749
        %v764 = vmul.f32 %v760, %v751
        %v765 = vmul.f32 %v761, 0.044715
        %v766 = vmul.f32 %v762, 0.044715
        %v767 = vmul.f32 %v763, 0.044715
        %v768 = vmul.f32 %v764, 0.044715
        %v769 = vadd.f32 %v743, %v765
        %v770 = vadd.f32 %v745, %v766
        %v771 = vadd.f32 %v749, %v767
        %v772 = vadd.f32 %v751, %v768
        %v773 = vmul.f32 %v769, 0.7978846
        %v774 = vmul.f32 %v770, 0.7978846
        %v775 = vmul.f32 %v771, 0.7978846
        %v776 = vmul.f32 %v772, 0.7978846
        %v777 = vtanh.pop %v773
        %v778 = vtanh.pop %v774
        %v779 = vtanh.pop %v775
        %v780 = vtanh.pop %v776
        %v781 = vadd.f32 %v777, 1.0
        %v782 = vadd.f32 %v778, 1.0
        %v783 = vadd.f32 %v779, 1.0
        %v784 = vadd.f32 %v780, 1.0
        %v785 = vmul.f32 %v753, %v781
        %v786 = vmul.f32 %v754, %v782
        %v787 = vmul.f32 %v755, %v783
        %v788 = vmul.f32 %v756, %v784
        %789 = vst [vmem:[%s457] sm:$0xff] %v785
        %790 = vst [vmem:[%s457 + $0x8] sm:$0xff] %v786
        %791 = vst [vmem:[%s457 + $0x10] sm:$0xff] %v787
        %792 = vst [vmem:[%s457 + $0x18] sm:$0xff] %v788
        %s793 = sand.u32 %s262, 1
        %s794 = scalar_lea.sflag [#allocation4], %s793
        %s795 = sand.u32 %s262, 1
        %s796 = smul.addr %s795, 32
        %s797 = scalar_lea.vmem [#allocation10], %s796
        // Predicated region
        $region73: #{tpu_custom_call.1} parent=55 // pred_check
          %p798 = pneg %p272
        $region74: #{tpu_custom_call.1} parent=55 // pred_check_branch
          %800 = sbr.rel (%p798) target = $region76
        $region75: #{tpu_custom_call.1} parent=55 // pred_region
          %s801 = smul.u32 2, %s35
          %s803 = ssub.s32 512, 512
          %804 = vsyncadd %s794, %s803
          %s805 = smul.addr %s34, 16
          %s806 = sadd.s32 %s801, %s805
          %s807 = smul.addr %s806, 128
          %s808 = scalar_lea.hbm %s9, %s807
          %s809 = sshll.u32 %s797, 4
          %s810 = int_to_ptr.vmem [resolvable:$true] %s809
          %815 = dma.vmem_to_hbm [thread:$0]  %s810, 512, %s808, %s794, 256, 1024, 16
        $region76: #{tpu_custom_call.1} parent=55 // pred_fallthru
          _
      $region56: #{tpu_custom_call.1} parent=5 // pred_fallthru
        _
      %p816 = scmp.le.s32.totalorder 2, %s25
      // Predicated region
      $region77: #{tpu_custom_call.1} parent=5 // pred_check
        %p817 = pneg %p816
      $region78: #{tpu_custom_call.1} parent=5 // pred_check_branch
        %819 = sbr.rel (%p817) target = $region80
      $region79: #{tpu_custom_call.1} parent=5 // pred_region
        %s820 = ssub.s32 %s25, 2
        // Predicated region
        $region81: #{tpu_custom_call.1} parent=79 // pred_check
          %p821 = pneg %p278
        $region82: #{tpu_custom_call.1} parent=79 // pred_check_branch
          %823 = sbr.rel (%p821) target = $region84
        $region83: #{tpu_custom_call.1} parent=79 // pred_region
          %s824 = sand.u32 %s263, 1
          %s825 = scalar_lea.sflag [#allocation4], %s824
          %s826 = sand.u32 %s263, 1
          %s827 = smul.addr %s826, 32
          %s828 = scalar_lea.vmem [#allocation10], %s827
          %829 = dma.done %s825, 512
        $region84: #{tpu_custom_call.1} parent=79 // pred_fallthru
          _
      $region80: #{tpu_custom_call.1} parent=5 // pred_fallthru
        _
    $region6: #{tpu_custom_call.1} parent=1 // loop_footer
      %s29 = sadd.s32 1, %s25
    $region7: #{tpu_custom_call.1} parent=1 // loop_footer_branch
      %24 = sbr.rel target = $region3
    $region8: #{tpu_custom_call.1} parent=1 // loop_exit
      _
    %830 = vsyncpa [#allocation3], 1
    %s831 = scalar_lea.sflag [#allocation3], 1
    %832 = vsyncpa %s831, 1
    %833 = vsyncpa [#allocation6], 1
    %s834 = scalar_lea.sflag [#allocation6], 1
    %835 = vsyncpa %s834, 1
    %836 = vsyncpa [#allocation9], 1
    %837 = vsyncpa [#allocation4], 1
    %s838 = scalar_lea.sflag [#allocation4], 1
    %839 = vsyncpa %s838, 1

</llo_original>
